<compile_context>
chip_gen: v7x
topology: tpu7x:2x2x1
jax: 0.10.0
libtpu: 0.0.40
codegen_flags: <defaults>
</compile_context>

<pallas_src>
import jax
import jax.numpy as jnp
from jax.experimental import pallas as pl
from jax.experimental.pallas import tpu as pltpu

_W = 32                  # CIFAR-10 spatial size (required by Linear(128*4*4, 256))
_P = _W * _W             # 1024 flattened spatial positions, kept at 32x32 throughout
_CIN0 = 8                # conv1 input channels padded 3 -> 8 (zero channels/weights)
_CONV_CFG = [(3, 32), (32, 32), (32, 32), (32, 64), (64, 64), (64, 128)]
_BN_EPS = 1e-5           # PyTorch BatchNorm2d default

# pltpu.roll follows jnp.roll semantics; probed once at runtime to be version-proof.
_ROLL_SHIFT_SIGN = -1


def _detect_roll_convention():
    """Set _ROLL_SHIFT_SIGN so that roll(x, sign*off) gives out[:, p] = x[:, p + off]."""
    global _ROLL_SHIFT_SIGN

    def probe(x_ref, o_ref):
        o_ref[...] = pltpu.roll(x_ref[...], 1, axis=1)

    x = jnp.tile(jnp.arange(128, dtype=jnp.float32)[None, :], (8, 1))
    out = pl.pallas_call(probe, out_shape=jax.ShapeDtypeStruct((8, 128), jnp.float32))(x)
    _ROLL_SHIFT_SIGN = -1 if float(out[0, 0]) == 127.0 else 1


# --------------------------------------------------------------------------
# The fused kernel (one image per grid step)
# --------------------------------------------------------------------------
def convnet_kernel(x_ref,
                   w1_ref, s1_ref, w2_ref, s2_ref, w3_ref, s3_ref,
                   w4_ref, s4_ref, w5_ref, s5_ref, w6_ref, s6_ref,
                   fc1w_ref, fc1b_ref, fc2w_ref, fc2b_ref,
                   o_ref):
    # (h, w) coordinates of every flattened spatial position (on the lane axis).
    p_idx = jax.lax.broadcasted_iota(jnp.int32, (1, _P), 1)
    hh = p_idx // _W
    ww = p_idx % _W

    def shift_spatial(x, off):
        # out[:, p] = x[:, (p + off) mod P]; wrapped entries are masked by the caller.
        if off == 0:
            return x
        return pltpu.roll(x, (_ROLL_SHIFT_SIGN * off) % _P, axis=1)

    def conv3x3_bn_relu(x, w_ref, shift_ref, s):
        # x: (Cin, P) f32, w_ref: (9, Cout, Cin) bf16 (BN scale folded in),
        # shift_ref: (Cout, 1) f32, s: dilation of the active grid (1, 2, 4).
        cout = w_ref.shape[1]
        acc = jnp.zeros((cout, _P), jnp.float32)
        for t in range(9):
            dh, dw = t // 3 - 1, t % 3 - 1
            valid = ((hh + s * dh >= 0) & (hh + s * dh < _W) &
                     (ww + s * dw >= 0) & (ww + s * dw < _W))
            tap = jnp.where(valid, shift_spatial(x, s * (dh * _W + dw)), 0.0)
            acc = acc + jnp.dot(w_ref[t], tap.astype(jnp.bfloat16),
                                preferred_element_type=jnp.float32)
        return jnp.maximum(acc + shift_ref[...], 0.0)

    def maxpool2x2(x, s):
        # 2x2 / stride-2 pool on the active grid with dilation s; the pooled map stays
        # embedded at its top-left corners (new dilation 2*s).
        a = x
        b = shift_spatial(x, s)
        c = shift_spatial(x, s * _W)
        d = shift_spatial(x, s * (_W + 1))
        return jnp.maximum(jnp.maximum(a, b), jnp.maximum(c, d))

    x = x_ref[...]                                   # (8, 1024) f32

    x = conv3x3_bn_relu(x, w1_ref, s1_ref, 1)
    x = conv3x3_bn_relu(x, w2_ref, s2_ref, 1)
    x = maxpool2x2(x, 1)                             # 32x32 -> 16x16 (dilation 2)
    x = conv3x3_bn_relu(x, w3_ref, s3_ref, 2)
    x = conv3x3_bn_relu(x, w4_ref, s4_ref, 2)
    x = maxpool2x2(x, 2)                             # 16x16 -> 8x8   (dilation 4)
    x = conv3x3_bn_relu(x, w5_ref, s5_ref, 4)
    x = conv3x3_bn_relu(x, w6_ref, s6_ref, 4)
    x = maxpool2x2(x, 4)                             # 8x8  -> 4x4    (dilation 8)

    # FC head.  The 4x4x128 map lives at columns p = 256*i + 8*j (PyTorch flatten order
    # c*16 + i*4 + j is handled by the per-position regrouping of the fc1 weight).
    h = fc1b_ref[...]                                # (256, 1) f32
    for k in range(16):
        i, j = k // 4, k % 4
        p = 256 * i + 8 * j
        col = x[:, p:p + 1].astype(jnp.bfloat16)     # (128, 1)
        h = h + jnp.dot(fc1w_ref[k], col, preferred_element_type=jnp.float32)
    h = jnp.maximum(h, 0.0).astype(jnp.bfloat16)
    o_ref[...] = (jnp.dot(fc2w_ref[...], h, preferred_element_type=jnp.float32)
                  + fc2b_ref[...])                   # (128, 1), num_class padded to 128


# --------------------------------------------------------------------------
# Wrapper
# --------------------------------------------------------------------------
def convnet_forward(x_nchw, params, num_class=10):
    N, C, H, Wd = x_nchw.shape
    assert (C, H, Wd) == (3, _W, _W), "this network requires 3x32x32 inputs"
    x = x_nchw.astype(jnp.float32).reshape(N, 3, _P)
    x = jnp.pad(x, ((0, 0), (0, _CIN0 - 3), (0, 0)))           # pad channels 3 -> 8

    flat = [x]
    specs = [pl.BlockSpec((None, _CIN0, _P), lambda n: (n, 0, 0))]
    for i in range(6):
        for name in ("w", "shift"):
            a = params[f"conv{i + 1}"][name]
            flat.append(a)
            specs.append(pl.BlockSpec(a.shape, lambda n, nd=a.ndim: (0,) * nd))
    for lname in ("fc1", "fc2"):
        for name in ("w", "b"):
            a = params[lname][name]
            flat.append(a)
            specs.append(pl.BlockSpec(a.shape, lambda n, nd=a.ndim: (0,) * nd))

    out = pl.pallas_call(
        convnet_kernel,
        out_shape=jax.ShapeDtypeStruct((N, 128, 1), jnp.float32),
        grid=(N,),
        in_specs=specs,
        out_specs=pl.BlockSpec((None, 128, 1), lambda n: (n, 0, 0)),
        compiler_params=pltpu.CompilerParams(
            dimension_semantics=("parallel",),
            vmem_limit_bytes=32 * 1024 * 1024),
    )(*flat)
    return out[:, :num_class, 0]


# --------------------------------------------------------------------------
# Parameters (deterministic synthetic init; shapes mirror the nn.Module)
# --------------------------------------------------------------------------
def init_params(key, num_class=10):
    params, ref = {}, {}
    for i, (cin, cout) in enumerate(_CONV_CFG):
        key, kw, kb = jax.random.split(key, 3)
        w = jax.random.normal(kw, (cout, cin, 3, 3), jnp.float32) / jnp.sqrt(9.0 * cin)
        b = jax.random.normal(kb, (cout,), jnp.float32) * 0.01
        # BatchNorm2d defaults: gamma=1, beta=0, running_mean=0, running_var=1.
        scale = jnp.ones((cout,)) / jnp.sqrt(jnp.ones((cout,)) + _BN_EPS)
        w_folded = (w * scale[:, None, None, None]).astype(jnp.bfloat16)   # BN scale -> W
        shift = ((b - 0.0) * scale + 0.0).astype(jnp.float32)              # bias folded
        cin_pad = _CIN0 if i == 0 else cin
        w9 = jnp.zeros((9, cout, cin_pad), jnp.bfloat16)
        w9 = w9.at[:, :, :cin].set(
            jnp.transpose(w_folded, (2, 3, 0, 1)).reshape(9, cout, cin))   # [t, out, in]
        params[f"conv{i + 1}"] = {"w": w9, "shift": shift.reshape(cout, 1)}
        ref[f"conv{i + 1}"] = {"w": w_folded.astype(jnp.float32), "shift": shift}

    key, k1, k2, k3, k4 = jax.random.split(key, 5)
    w1 = (jax.random.normal(k1, (256, 2048), jnp.float32) / jnp.sqrt(2048.0)).astype(jnp.bfloat16)
    b1 = jax.random.normal(k2, (256,), jnp.float32) * 0.01
    w2 = (jax.random.normal(k3, (num_class, 256), jnp.float32) / jnp.sqrt(256.0)).astype(jnp.bfloat16)
    b2 = jax.random.normal(k4, (num_class,), jnp.float32) * 0.01
    # fc1 regrouped per spatial position: w1r[k, o, c] = w1[o, c*16 + k]
    w1r = jnp.transpose(w1.reshape(256, 128, 16), (2, 0, 1))
    w2p = jnp.zeros((128, 256), jnp.bfloat16).at[:num_class].set(w2)       # pad classes->128
    b2p = jnp.zeros((128, 1), jnp.float32).at[:num_class, 0].set(b2)
    params["fc1"] = {"w": w1r, "b": b1.reshape(256, 1)}
    params["fc2"] = {"w": w2p, "b": b2p}
    ref["fc1"] = {"w": w1.astype(jnp.float32), "b": b1}
    ref["fc2"] = {"w": w2.astype(jnp.float32), "b": b2}
    return params, ref


# --------------------------------------------------------------------------
# Plain-JAX reference (same bf16-rounded weights) for a numerical cross-check
# --------------------------------------------------------------------------
def reference_forward(x_nchw, ref, num_class=10):
    def conv_bn_relu(x, w, shift):
        y = jax.lax.conv_general_dilated(
            x, w, window_strides=(1, 1), padding="SAME",
            dimension_numbers=("NCHW", "OIHW", "NCHW"))
        return jax.nn.relu(y + shift[None, :, None, None])

    def pool(x):
        return jax.lax.reduce_window(x, -jnp.inf, jax.lax.max,
                                     (1, 1, 2, 2), (1, 1, 2, 2), "VALID")

    x = x_nchw.astype(jnp.float32)
    x = conv_bn_relu(x, ref["conv1"]["w"], ref["conv1"]["shift"])
    x = conv_bn_relu(x, ref["conv2"]["w"], ref["conv2"]["shift"])
    x = pool(x)
    x = conv_bn_relu(x, ref["conv3"]["w"], ref["conv3"]["shift"])
    x = conv_bn_relu(x, ref["conv4"]["w"], ref["conv4"]["shift"])
    x = pool(x)
    x = conv_bn_relu(x, ref["conv5"]["w"], ref["conv5"]["shift"])
    x = conv_bn_relu(x, ref["conv6"]["w"], ref["conv6"]["shift"])
    x = pool(x)
    x = x.reshape(x.shape[0], -1)                        # NCHW (C,H,W) flatten order
    h = jax.nn.relu(x @ ref["fc1"]["w"].T + ref["fc1"]["b"])
    return h @ ref["fc2"]["w"].T + ref["fc2"]["b"]


if __name__ == "__main__":
    key = jax.random.PRNGKey(0)
    key, xkey = jax.random.split(key)

    # CIFAR-10 sized input (spatial must be 32 to match Linear(128*4*4, 256)), batch 2.
    x = jax.random.normal(xkey, (2, 3, 32, 32), jnp.float32)
    params, ref_params = init_params(key, num_class=10)

    _detect_roll_convention()

    fwd = jax.jit(convnet_forward)
    logits = fwd(x, params)
    jax.block_until_ready(logits)

    assert logits.shape == (2, 10), logits.shape
    assert logits.dtype == jnp.float32
    assert bool(jnp.all(jnp.isfinite(logits)))

    # Cross-check against the XLA reference (same bf16 weights; loose tol for bf16 rounding).
    expect = reference_forward(x, ref_params, num_class=10)
    rel = float(jnp.max(jnp.abs(logits - expect)) / (jnp.max(jnp.abs(expect)) + 1e-6))
    assert rel < 0.1, f"kernel/reference mismatch: rel_err={rel}"

    print("KERNEL_OK")
</pallas_src>

<mosaic_0001>
module attributes {stable_mosaic.version = 11 : i64} {
  func.func @probe(%arg0: memref<8x128xf32, #tpu.memory_space<vmem>>, %arg1: memref<8x128xf32, #tpu.memory_space<vmem>>) attributes {dimension_semantics = [], scalar_prefetch = 0 : i64, scratch_operands = 0 : i64, tpu.core_type = #tpu.core_type<tc>} {
    %c0 = arith.constant 0 : index
    %c0_0 = arith.constant 0 : index
    %0 = vector.load %arg0[%c0, %c0_0] : memref<8x128xf32, #tpu.memory_space<vmem>>, vector<8x128xf32>
    %c1_i32 = arith.constant 1 : i32
    %1 = tpu.dynamic_rotate %0 by %c1_i32 dim 1 : vector<8x128xf32>, i32 -> vector<8x128xf32>
    %c0_1 = arith.constant 0 : index
    %c0_2 = arith.constant 0 : index
    %2 = vector.load %arg1[%c0_1, %c0_2] : memref<8x128xf32, #tpu.memory_space<vmem>>, vector<8x128xf32>
    tpu.vector_store %arg1[%c0_1, %c0_2], %1 {strides = array<i32>} : memref<8x128xf32, #tpu.memory_space<vmem>>, vector<8x128xf32>,
    return
  }
}

</mosaic_0001>

<llo_original>
// kernel: tpu_custom_call.1
$region0: #{tpu_custom_call.1}
  #allocation0 [shape = 'u32[]', space=smem, size = 0x4, offset = 0x4, fixed_abs, tag = 'smem constant byte address 0x4 - core index']
  #allocation1 [shape = 'u32[144,128]{1,0:T(1,128)}', space=vmem, size = 0x12000, scoped, tag = 'internal scratch']
  %s0 = inlined_call_operand.hbm [shape: f32[8,128], index: 0, kind: input, shape index: {}]
  %s1 = inlined_call_operand.hbm [shape: f32[8,128], index: 1, kind: output, shape index: {}]
  %s2 = sld [smem:[#allocation0]]
  $region18: #{tpu_custom_call.1} parent=0
    _
  %s4 = ssub.s32 1, %s2
  %s5 = scalar_select 0, %s4, %s2
  $region1: #{tpu_custom_call.1} parent=0
    #allocation2 [shape = 'u8[4096]{0}', space=vmem, size = 0x1000, scoped, tag = 'input window, operand 0, single buffered']
    #allocation3 [shape = 's32[1]{0}', space=sflag, size = 0x4, scoped, tag = 'scoped memory for tpu_custom_call.1']
    #allocation4 [shape = 's32[1]{0}', space=sflag, size = 0x4, scoped, tag = 'scoped memory for tpu_custom_call.1']
    #allocation5 [shape = 'u8[4096]{0}', space=vmem, size = 0x1000, scoped, tag = 'output window, operand 0, single buffered']
    %6 = vsyncpa [#allocation3], 0
    %7 = vsyncpa [#allocation4], 0
    // Predicated region
    $region2: #{tpu_custom_call.1} parent=1 // pred_check
      _
    $region3: #{tpu_custom_call.1} parent=1 // pred_check_branch
      %9 = sbr.rel (0) target = $region5
    $region4: #{tpu_custom_call.1} parent=1 // pred_region
      %s11 = ssub.s32 128, 128
      %12 = vsyncadd [#allocation3], %s11
      %s14 = sshll.u32 [#allocation2], 4
      %s15 = int_to_ptr.vmem [resolvable:$true] %s14
      %17 = dma.hbm_to_vmem [thread:$0]  %s0, 128, %s15, [#allocation3]
    $region5: #{tpu_custom_call.1} parent=1 // pred_fallthru
      _
    // Predicated region
    $region6: #{tpu_custom_call.1} parent=1 // pred_check
      _
    $region7: #{tpu_custom_call.1} parent=1 // pred_check_branch
      %19 = sbr.rel (0) target = $region9
    $region8: #{tpu_custom_call.1} parent=1 // pred_region
      %20 = dma.done [#allocation3], 128
    $region9: #{tpu_custom_call.1} parent=1 // pred_fallthru
      _
    %v21 = vld [vmem:[#allocation2] sm:$0xff]
    %22 = vrot.lane.b32.xlu0 %v21, 1
    %v23 = vpop.permute.xlu0 %22
    %24 = vst [vmem:[#allocation5] sm:$0xff] %v23
    // Predicated region
    $region10: #{tpu_custom_call.1} parent=1 // pred_check
      _
    $region11: #{tpu_custom_call.1} parent=1 // pred_check_branch
      %26 = sbr.rel (0) target = $region13
    $region12: #{tpu_custom_call.1} parent=1 // pred_region
      %s28 = ssub.s32 128, 128
      %29 = vsyncadd [#allocation4], %s28
      %s31 = sshll.u32 [#allocation5], 4
      %s32 = int_to_ptr.vmem [resolvable:$true] %s31
      %34 = dma.vmem_to_hbm [thread:$0]  %s32, 128, %s1, [#allocation4]
    $region13: #{tpu_custom_call.1} parent=1 // pred_fallthru
      _
    // Predicated region
    $region14: #{tpu_custom_call.1} parent=1 // pred_check
      _
    $region15: #{tpu_custom_call.1} parent=1 // pred_check_branch
      %36 = sbr.rel (0) target = $region17
    $region16: #{tpu_custom_call.1} parent=1 // pred_region
      %37 = dma.done [#allocation4], 128
    $region17: #{tpu_custom_call.1} parent=1 // pred_fallthru
      _
    %38 = vsyncpa [#allocation3], 1
    %39 = vsyncpa [#allocation4], 1

</llo_original>
